<compile_context>
chip_gen: v5e
topology: v5e:2x2
jax: 0.10.0
libtpu: 0.0.40
codegen_flags: <defaults>
</compile_context>

<pallas_src>
import functools

import jax
import jax.numpy as jnp
from jax.experimental import pallas as pl
from jax.experimental.pallas import tpu as pltpu


def _pick_time_tile(T: int) -> int:
    """Largest nice (multiple-of-8) tile that divides T; else take T whole."""
    for tt in (512, 256, 128, 64, 32, 16, 8):
        if T % tt == 0:
            return tt
    return T


@functools.partial(jax.jit, static_argnames=("T",))
def feature_assembler(feat_static_cat, feat_static_real,
                      feat_dynamic_cat, feat_dynamic_real,
                      static_tables, dynamic_tables, *, T):
    """
    feat_static_cat : (N, F_sc) int32 (if static_tables) or float32
    feat_static_real: (N, C_sr) float32
    feat_dynamic_cat: (N, T, F_dc) int32 (if dynamic_tables) or float32
    feat_dynamic_real:(N, T, C_dr) float32
    static_tables / dynamic_tables: tuples of (cardinality_i, dim_i) float32 tables (may be empty)
    returns (N, T, D_total) float32
    """
    N = feat_static_cat.shape[0]
    F_sc = feat_static_cat.shape[-1]
    C_sr = feat_static_real.shape[-1]
    F_dc = feat_dynamic_cat.shape[-1]
    C_dr = feat_dynamic_real.shape[-1]

    s_cards = tuple(t.shape[0] for t in static_tables)
    s_dims = tuple(t.shape[1] for t in static_tables)
    d_cards = tuple(t.shape[0] for t in dynamic_tables)
    d_dims = tuple(t.shape[1] for t in dynamic_tables)

    D_sc = sum(s_dims) if static_tables else F_sc
    D_dc = sum(d_dims) if dynamic_tables else F_dc
    D_total = D_sc + C_sr + D_dc + C_dr

    TT = _pick_time_tile(T)
    n_t_tiles = T // TT
    n_s_tbl = len(static_tables)
    n_d_tbl = len(dynamic_tables)

    # Give the static (per-batch) features an explicit time axis of 1 so their
    # blocks' last two dims equal the full array dims.
    sc3 = feat_static_cat.reshape(N, 1, F_sc)
    sr3 = feat_static_real.reshape(N, 1, C_sr)

    def kernel(*refs):
        sc_ref, sr_ref, dc_ref, dr_ref = refs[:4]
        tbl_refs = refs[4:4 + n_s_tbl + n_d_tbl]
        out_ref = refs[-1]

        pieces = []

        # ---- static categorical: FeatureEmbedder (one-hot @ table) or passthrough ----
        sc = sc_ref[0]                                            # (1, F_sc)
        if n_s_tbl:
            embs = []
            for f in range(n_s_tbl):
                card = s_cards[f]
                tbl = tbl_refs[f][...]                            # (card, d_f) resident
                col = sc[:, f:f + 1]                              # (1, 1) int32
                onehot = (col == jax.lax.broadcasted_iota(
                    jnp.int32, (1, card), 1)).astype(jnp.float32)
                embs.append(jnp.dot(onehot, tbl,
                                    preferred_element_type=jnp.float32))
            s_cat = embs[0] if len(embs) == 1 else jnp.concatenate(embs, axis=-1)
        else:
            s_cat = sc.astype(jnp.float32)
        pieces.append(jnp.broadcast_to(s_cat, (TT, D_sc)))        # expand over time tile

        # ---- static real, broadcast over time tile ----
        pieces.append(jnp.broadcast_to(sr_ref[0].astype(jnp.float32), (TT, C_sr)))

        # ---- dynamic categorical: FeatureEmbedder or passthrough ----
        dc = dc_ref[0]                                            # (TT, F_dc)
        if n_d_tbl:
            embs = []
            for f in range(n_d_tbl):
                card = d_cards[f]
                tbl = tbl_refs[n_s_tbl + f][...]                  # (card, d_f) resident
                col = dc[:, f:f + 1]                              # (TT, 1) int32
                onehot = (col == jax.lax.broadcasted_iota(
                    jnp.int32, (TT, card), 1)).astype(jnp.float32)
                embs.append(jnp.dot(onehot, tbl,
                                    preferred_element_type=jnp.float32))
            d_cat = embs[0] if len(embs) == 1 else jnp.concatenate(embs, axis=-1)
        else:
            d_cat = dc.astype(jnp.float32)
        pieces.append(d_cat)

        # ---- dynamic real ----
        pieces.append(dr_ref[0].astype(jnp.float32))

        out_ref[0] = jnp.concatenate(pieces, axis=-1)             # (TT, D_total)

    in_specs = [
        pl.BlockSpec((1, 1, F_sc), lambda n, t: (n, 0, 0)),       # static cat (per-batch)
        pl.BlockSpec((1, 1, C_sr), lambda n, t: (n, 0, 0)),       # static real (per-batch)
        pl.BlockSpec((1, TT, F_dc), lambda n, t: (n, t, 0)),      # dynamic cat (tiled over T)
        pl.BlockSpec((1, TT, C_dr), lambda n, t: (n, t, 0)),      # dynamic real (tiled over T)
    ]
    for tbl in (*static_tables, *dynamic_tables):
        # constant index_map -> table stays resident in VMEM, not re-DMA'd per step
        in_specs.append(pl.BlockSpec(tbl.shape, lambda n, t: (0, 0)))

    out_specs = pl.BlockSpec((1, TT, D_total), lambda n, t: (n, t, 0))

    # Advisory cost estimate: the op is HBM-bound; flops come only from the
    # tiny one-hot embedding matmuls.
    flops = (2 * N * sum(c * d for c, d in zip(s_cards, s_dims))
             + 2 * N * T * sum(c * d for c, d in zip(d_cards, d_dims)))
    bytes_in = (sc3.size * sc3.dtype.itemsize
                + sr3.size * sr3.dtype.itemsize
                + feat_dynamic_cat.size * feat_dynamic_cat.dtype.itemsize
                + feat_dynamic_real.size * feat_dynamic_real.dtype.itemsize
                + sum(t.size * t.dtype.itemsize
                      for t in (*static_tables, *dynamic_tables)))
    bytes_out = N * T * D_total * 4

    return pl.pallas_call(
        kernel,
        out_shape=jax.ShapeDtypeStruct((N, T, D_total), jnp.float32),
        grid=(N, n_t_tiles),
        in_specs=in_specs,
        out_specs=out_specs,
        compiler_params=pltpu.CompilerParams(
            dimension_semantics=("parallel", "parallel"),
            vmem_limit_bytes=32 * 1024 * 1024,
        ),
        cost_estimate=pl.CostEstimate(
            flops=flops, transcendentals=0, bytes_accessed=bytes_in + bytes_out),
    )(sc3, sr3, feat_dynamic_cat, feat_dynamic_real,
      *static_tables, *dynamic_tables)


# ------------------------- pure-JAX reference -------------------------

def _embed_ref(feat, tables):
    outs = [tables[f][feat[..., f]] for f in range(len(tables))]
    return jnp.concatenate(outs, axis=-1)


def feature_assembler_ref(sc, sr, dc, dr, static_tables, dynamic_tables, T):
    N = sc.shape[0]
    s_cat = _embed_ref(sc, static_tables) if static_tables else sc.astype(jnp.float32)
    s_cat = jnp.broadcast_to(s_cat[:, None, :], (N, T, s_cat.shape[-1]))
    s_real = jnp.broadcast_to(sr.astype(jnp.float32)[:, None, :], (N, T, sr.shape[-1]))
    d_cat = _embed_ref(dc, dynamic_tables) if dynamic_tables else dc.astype(jnp.float32)
    d_real = dr.astype(jnp.float32)
    return jnp.concatenate([s_cat, s_real, d_cat, d_real], axis=-1)


if __name__ == "__main__":
    key = jax.random.PRNGKey(0)
    ks = jax.random.split(key, 10)

    # --------- config 1: with FeatureEmbedder for static & dynamic cats ---------
    N, T = 2, 8
    s_cards, s_dims = (5, 7), (3, 4)      # static  FeatureEmbedder
    d_cards, d_dims = (11, 3), (6, 2)     # dynamic FeatureEmbedder
    C_sr, C_dr = 4, 5

    static_tables = tuple(
        jax.random.normal(ks[i], (c, d), jnp.float32)
        for i, (c, d) in enumerate(zip(s_cards, s_dims)))
    dynamic_tables = tuple(
        jax.random.normal(ks[2 + i], (c, d), jnp.float32)
        for i, (c, d) in enumerate(zip(d_cards, d_dims)))

    feat_static_cat = jnp.stack(
        [jax.random.randint(ks[4 + i], (N,), 0, c, jnp.int32)
         for i, c in enumerate(s_cards)], axis=-1)                       # (N, 2)
    feat_dynamic_cat = jnp.stack(
        [jax.random.randint(ks[6 + i], (N, T), 0, c, jnp.int32)
         for i, c in enumerate(d_cards)], axis=-1)                       # (N, T, 2)
    feat_static_real = jax.random.normal(ks[8], (N, C_sr), jnp.float32)   # (N, 4)
    feat_dynamic_real = jax.random.normal(ks[9], (N, T, C_dr), jnp.float32)  # (N, T, 5)

    out = feature_assembler(feat_static_cat, feat_static_real,
                            feat_dynamic_cat, feat_dynamic_real,
                            static_tables, dynamic_tables, T=T)
    jax.block_until_ready(out)

    ref = feature_assembler_ref(feat_static_cat, feat_static_real,
                                feat_dynamic_cat, feat_dynamic_real,
                                static_tables, dynamic_tables, T)
    D_total = sum(s_dims) + C_sr + sum(d_dims) + C_dr
    assert out.shape == (N, T, D_total)
    assert jnp.allclose(out, ref, atol=1e-5, rtol=1e-5)

    # --------- config 2: no embedders (passthrough path of the module) ---------
    fsc = jax.random.normal(jax.random.PRNGKey(1), (N, 4), jnp.float32)
    fsr = jax.random.normal(jax.random.PRNGKey(2), (N, 4), jnp.float32)
    fdc = jax.random.normal(jax.random.PRNGKey(3), (N, T, 4), jnp.float32)
    fdr = jax.random.normal(jax.random.PRNGKey(4), (N, T, 4), jnp.float32)

    out2 = feature_assembler(fsc, fsr, fdc, fdr, (), (), T=T)
    jax.block_until_ready(out2)
    ref2 = feature_assembler_ref(fsc, fsr, fdc, fdr, (), (), T)
    assert out2.shape == (N, T, 16)
    assert jnp.allclose(out2, ref2, atol=1e-5, rtol=1e-5)

    print("KERNEL_OK")
</pallas_src>

<mosaic_0001>
module attributes {stable_mosaic.version = 11 : i64} {
  func.func @kernel(%arg0: i32, %arg1: i32, %arg2: memref<1x1x2xi32, #tpu.memory_space<vmem>>, %arg3: memref<1x1x4xf32, #tpu.memory_space<vmem>>, %arg4: memref<1x8x2xi32, #tpu.memory_space<vmem>>, %arg5: memref<1x8x5xf32, #tpu.memory_space<vmem>>, %arg6: memref<5x3xf32, #tpu.memory_space<vmem>>, %arg7: memref<7x4xf32, #tpu.memory_space<vmem>>, %arg8: memref<11x6xf32, #tpu.memory_space<vmem>>, %arg9: memref<3x2xf32, #tpu.memory_space<vmem>>, %arg10: memref<1x8x24xf32, #tpu.memory_space<vmem>>) attributes {dimension_semantics = [#tpu.dimension_semantics<parallel>, #tpu.dimension_semantics<parallel>], iteration_bounds = array<i64: 2, 1>, scalar_prefetch = 0 : i64, scratch_operands = 0 : i64, tpu.core_type = #tpu.core_type<tc>, window_params = [{transform_indices = @transform_0, window_bounds = array<i64: 1, 1, 2>}, {transform_indices = @transform_1, window_bounds = array<i64: 1, 1, 4>}, {transform_indices = @transform_2, window_bounds = array<i64: 1, 8, 2>}, {transform_indices = @transform_3, window_bounds = array<i64: 1, 8, 5>}, {pipeline_mode = #tpu.pipeline_mode<synchronous>, transform_indices = @transform_4, window_bounds = array<i64: 5, 3>}, {pipeline_mode = #tpu.pipeline_mode<synchronous>, transform_indices = @transform_5, window_bounds = array<i64: 7, 4>}, {pipeline_mode = #tpu.pipeline_mode<synchronous>, transform_indices = @transform_6, window_bounds = array<i64: 11, 6>}, {pipeline_mode = #tpu.pipeline_mode<synchronous>, transform_indices = @transform_7, window_bounds = array<i64: 3, 2>}, {transform_indices = @transform_8, window_bounds = array<i64: 1, 8, 24>}]} {
    %c0 = arith.constant 0 : index
    %c0_0 = arith.constant 0 : index
    %c0_1 = arith.constant 0 : index
    %0 = vector.load %arg2[%c0, %c0_0, %c0_1] : memref<1x1x2xi32, #tpu.memory_space<vmem>>, vector<1x1x2xi32>
    %1 = vector.shape_cast %0 : vector<1x1x2xi32> to vector<1x2xi32>
    %c0_2 = arith.constant 0 : index
    %c0_3 = arith.constant 0 : index
    %2 = vector.load %arg6[%c0_2, %c0_3] : memref<5x3xf32, #tpu.memory_space<vmem>>, vector<5x3xf32>
    %3 = vector.extract_strided_slice %1 {offsets = [0, 0], sizes = [1, 1], strides = [1, 1]} : vector<1x2xi32> to vector<1x1xi32>
    %4 = tpu.iota {dimensions = array<i32: 1>} : vector<1x5xi32>
    %5 = vector.broadcast %3 : vector<1x1xi32> to vector<1x5xi32>
    %6 = arith.cmpi eq, %5, %4 : vector<1x5xi32>
    %7 = arith.extui %6 : vector<1x5xi1> to vector<1x5xi32>
    %8 = arith.sitofp %7 : vector<1x5xi32> to vector<1x5xf32>
    %cst = arith.constant dense<0.000000e+00> : vector<1x3xf32>
    %9 = tpu.matmul %8, %2, %cst {dimension_numbers = #tpu.dot_dimension_numbers<[1], [0], [0], [1], [0, 0, 1, 1], [], []>} : vector<1x5xf32>, vector<5x3xf32>, vector<1x3xf32> -> vector<1x3xf32>
    %c0_4 = arith.constant 0 : index
    %c0_5 = arith.constant 0 : index
    %10 = vector.load %arg7[%c0_4, %c0_5] : memref<7x4xf32, #tpu.memory_space<vmem>>, vector<7x4xf32>
    %11 = vector.extract_strided_slice %1 {offsets = [0, 1], sizes = [1, 1], strides = [1, 1]} : vector<1x2xi32> to vector<1x1xi32>
    %12 = tpu.iota {dimensions = array<i32: 1>} : vector<1x7xi32>
    %13 = vector.broadcast %11 : vector<1x1xi32> to vector<1x7xi32>
    %14 = arith.cmpi eq, %13, %12 : vector<1x7xi32>
    %15 = arith.extui %14 : vector<1x7xi1> to vector<1x7xi32>
    %16 = arith.sitofp %15 : vector<1x7xi32> to vector<1x7xf32>
    %cst_6 = arith.constant dense<0.000000e+00> : vector<1x4xf32>
    %17 = tpu.matmul %16, %10, %cst_6 {dimension_numbers = #tpu.dot_dimension_numbers<[1], [0], [0], [1], [0, 0, 1, 1], [], []>} : vector<1x7xf32>, vector<7x4xf32>, vector<1x4xf32> -> vector<1x4xf32>
    %18 = tpu.concatenate %9, %17 in 1 : vector<1x3xf32>, vector<1x4xf32> -> vector<1x7xf32>
    %19 = vector.shape_cast %18 : vector<1x7xf32> to vector<1x7xf32>
    %20 = vector.broadcast %19 : vector<1x7xf32> to vector<8x7xf32>
    %c0_7 = arith.constant 0 : index
    %c0_8 = arith.constant 0 : index
    %c0_9 = arith.constant 0 : index
    %21 = vector.load %arg3[%c0_7, %c0_8, %c0_9] : memref<1x1x4xf32, #tpu.memory_space<vmem>>, vector<1x1x4xf32>
    %22 = vector.shape_cast %21 : vector<1x1x4xf32> to vector<1x4xf32>
    %23 = vector.shape_cast %22 : vector<1x4xf32> to vector<1x4xf32>
    %24 = vector.broadcast %23 : vector<1x4xf32> to vector<8x4xf32>
    %c0_10 = arith.constant 0 : index
    %c0_11 = arith.constant 0 : index
    %c0_12 = arith.constant 0 : index
    %25 = vector.load %arg4[%c0_10, %c0_11, %c0_12] : memref<1x8x2xi32, #tpu.memory_space<vmem>>, vector<1x8x2xi32>
    %26 = vector.shape_cast %25 : vector<1x8x2xi32> to vector<8x2xi32>
    %c0_13 = arith.constant 0 : index
    %c0_14 = arith.constant 0 : index
    %27 = vector.load %arg8[%c0_13, %c0_14] : memref<11x6xf32, #tpu.memory_space<vmem>>, vector<11x6xf32>
    %28 = vector.extract_strided_slice %26 {offsets = [0, 0], sizes = [8, 1], strides = [1, 1]} : vector<8x2xi32> to vector<8x1xi32>
    %29 = tpu.iota {dimensions = array<i32: 1>} : vector<8x11xi32>
    %30 = vector.broadcast %28 : vector<8x1xi32> to vector<8x11xi32>
    %31 = arith.cmpi eq, %30, %29 : vector<8x11xi32>
    %32 = arith.extui %31 : vector<8x11xi1> to vector<8x11xi32>
    %33 = arith.sitofp %32 : vector<8x11xi32> to vector<8x11xf32>
    %cst_15 = arith.constant dense<0.000000e+00> : vector<8x6xf32>
    %34 = tpu.matmul %33, %27, %cst_15 {dimension_numbers = #tpu.dot_dimension_numbers<[1], [0], [0], [1], [0, 0, 1, 1], [], []>} : vector<8x11xf32>, vector<11x6xf32>, vector<8x6xf32> -> vector<8x6xf32>
    %c0_16 = arith.constant 0 : index
    %c0_17 = arith.constant 0 : index
    %35 = vector.load %arg9[%c0_16, %c0_17] : memref<3x2xf32, #tpu.memory_space<vmem>>, vector<3x2xf32>
    %36 = vector.extract_strided_slice %26 {offsets = [0, 1], sizes = [8, 1], strides = [1, 1]} : vector<8x2xi32> to vector<8x1xi32>
    %37 = tpu.iota {dimensions = array<i32: 1>} : vector<8x3xi32>
    %38 = vector.broadcast %36 : vector<8x1xi32> to vector<8x3xi32>
    %39 = arith.cmpi eq, %38, %37 : vector<8x3xi32>
    %40 = arith.extui %39 : vector<8x3xi1> to vector<8x3xi32>
    %41 = arith.sitofp %40 : vector<8x3xi32> to vector<8x3xf32>
    %cst_18 = arith.constant dense<0.000000e+00> : vector<8x2xf32>
    %42 = tpu.matmul %41, %35, %cst_18 {dimension_numbers = #tpu.dot_dimension_numbers<[1], [0], [0], [1], [0, 0, 1, 1], [], []>} : vector<8x3xf32>, vector<3x2xf32>, vector<8x2xf32> -> vector<8x2xf32>
    %43 = tpu.concatenate %34, %42 in 1 : vector<8x6xf32>, vector<8x2xf32> -> vector<8x8xf32>
    %c0_19 = arith.constant 0 : index
    %c0_20 = arith.constant 0 : index
    %c0_21 = arith.constant 0 : index
    %44 = vector.load %arg5[%c0_19, %c0_20, %c0_21] : memref<1x8x5xf32, #tpu.memory_space<vmem>>, vector<1x8x5xf32>
    %45 = vector.shape_cast %44 : vector<1x8x5xf32> to vector<8x5xf32>
    %46 = tpu.concatenate %20, %24, %43, %45 in 1 : vector<8x7xf32>, vector<8x4xf32>, vector<8x8xf32>, vector<8x5xf32> -> vector<8x24xf32>
    %c0_22 = arith.constant 0 : index
    %c0_23 = arith.constant 0 : index
    %c0_24 = arith.constant 0 : index
    %47 = vector.load %arg10[%c0_22, %c0_23, %c0_24] : memref<1x8x24xf32, #tpu.memory_space<vmem>>, vector<1x8x24xf32>
    %48 = vector.shape_cast %47 : vector<1x8x24xf32> to vector<8x24xf32>
    %49 = vector.shape_cast %46 : vector<8x24xf32> to vector<1x8x24xf32>
    tpu.vector_store %arg10[%c0_22, %c0_23, %c0_24], %49 {strides = array<i32>} : memref<1x8x24xf32, #tpu.memory_space<vmem>>, vector<1x8x24xf32>,
    return
  }
  func.func @transform_0(%arg0: i32, %arg1: i32) -> (i32, i32, i32) {
    %c0_i32 = arith.constant 0 : i32
    %c0_i32_0 = arith.constant 0 : i32
    %c0_i32_1 = arith.constant 0 : i32
    return %arg0, %c0_i32, %c0_i32_0 : i32, i32, i32
  }
  func.func @transform_1(%arg0: i32, %arg1: i32) -> (i32, i32, i32) {
    %c0_i32 = arith.constant 0 : i32
    %c0_i32_0 = arith.constant 0 : i32
    %c0_i32_1 = arith.constant 0 : i32
    return %arg0, %c0_i32, %c0_i32_0 : i32, i32, i32
  }
  func.func @transform_2(%arg0: i32, %arg1: i32) -> (i32, i32, i32) {
    %c0_i32 = arith.constant 0 : i32
    %c0_i32_0 = arith.constant 0 : i32
    return %arg0, %arg1, %c0_i32 : i32, i32, i32
  }
  func.func @transform_3(%arg0: i32, %arg1: i32) -> (i32, i32, i32) {
    %c0_i32 = arith.constant 0 : i32
    %c0_i32_0 = arith.constant 0 : i32
    return %arg0, %arg1, %c0_i32 : i32, i32, i32
  }
  func.func @transform_4(%arg0: i32, %arg1: i32) -> (i32, i32) {
    %c0_i32 = arith.constant 0 : i32
    %c0_i32_0 = arith.constant 0 : i32
    %c0_i32_1 = arith.constant 0 : i32
    return %c0_i32, %c0_i32_0 : i32, i32
  }
  func.func @transform_5(%arg0: i32, %arg1: i32) -> (i32, i32) {
    %c0_i32 = arith.constant 0 : i32
    %c0_i32_0 = arith.constant 0 : i32
    %c0_i32_1 = arith.constant 0 : i32
    return %c0_i32, %c0_i32_0 : i32, i32
  }
  func.func @transform_6(%arg0: i32, %arg1: i32) -> (i32, i32) {
    %c0_i32 = arith.constant 0 : i32
    %c0_i32_0 = arith.constant 0 : i32
    %c0_i32_1 = arith.constant 0 : i32
    return %c0_i32, %c0_i32_0 : i32, i32
  }
  func.func @transform_7(%arg0: i32, %arg1: i32) -> (i32, i32) {
    %c0_i32 = arith.constant 0 : i32
    %c0_i32_0 = arith.constant 0 : i32
    %c0_i32_1 = arith.constant 0 : i32
    return %c0_i32, %c0_i32_0 : i32, i32
  }
  func.func @transform_8(%arg0: i32, %arg1: i32) -> (i32, i32, i32) {
    %c0_i32 = arith.constant 0 : i32
    %c0_i32_0 = arith.constant 0 : i32
    return %arg0, %arg1, %c0_i32 : i32, i32, i32
  }
}

</mosaic_0001>

<llo_original>
// kernel: feature_assembler.1
$region0: #{feature_assembler.1}
  #allocation0 [shape = 'u32[]', space=smem, size = 0x4, offset = 0x4, fixed_abs, tag = 'smem constant byte address 0x4 - core index']
  #allocation1 [shape = 'u32[72,128]{1,0:T(1,128)}', space=vmem, size = 0x9000, scoped, tag = 'internal scratch']
  %s0 = inlined_call_operand.vmem [shape: s32[2,1,2], index: 0, kind: input, shape index: {}]
  %s1 = inlined_call_operand.vmem [shape: f32[2,1,4], index: 1, kind: input, shape index: {}]
  %s2 = inlined_call_operand.vmem [shape: s32[2,8,2], index: 2, kind: input, shape index: {}]
  %s3 = inlined_call_operand.vmem [shape: f32[2,8,5], index: 3, kind: input, shape index: {}]
  %s4 = inlined_call_operand.vmem [shape: f32[5,3], index: 4, kind: input, shape index: {}]
  %s5 = inlined_call_operand.vmem [shape: f32[7,4], index: 5, kind: input, shape index: {}]
  %s6 = inlined_call_operand.vmem [shape: f32[11,6], index: 6, kind: input, shape index: {}]
  %s7 = inlined_call_operand.vmem [shape: f32[3,2], index: 7, kind: input, shape index: {}]
  %s8 = inlined_call_operand.hbm [shape: f32[2,8,24], index: 8, kind: output, shape index: {}]
  %s9 = sld [smem:[#allocation0]]
  $region65: #{feature_assembler.1} parent=0
    _
  %s11 = ssub.s32 1, %s9
  %s12 = scalar_select 0, %s11, %s9
  $region1: #{feature_assembler.1} parent=0
    #allocation2 [shape = 'u8[8192]{0}', space=vmem, size = 0x2000, scoped, tag = 'output window, operand 0']
    #allocation3 [shape = 's32[2]{0}', space=sflag, size = 0x8, scoped, tag = 'scoped memory for feature_assembler.1']
    %13 = vsyncpa [#allocation3], 0
    %s14 = scalar_lea.sflag [#allocation3], 1
    %15 = vsyncpa %s14, 0
    loop: start=0, step=1, limit=4
    $region2: #{feature_assembler.1} parent=1 // loop_pre_header
      _
    $region3: #{feature_assembler.1} parent=1 // loop_header
      %s17 = sphi 0, %s21
      %p18 = scmp.ge.s32.totalorder %s17, 4
      %s24 = sphi 0, %s36
      %s25 = sphi 0, %s32
      %s26 = sphi 0, %s24
      %s27 = sphi 0, %s25
      %s28 = sphi 0, %s26
      %s29 = sphi 0, %s27
      %s39 = sphi 0, %s41
      %s42 = sphi 0, %s39
      %s43 = sphi 0, %s42
      %s59 = sphi 0, %s43
      %s65 = sphi 0, %s67
      %s68 = sphi 0, %s65
      %s69 = sphi 0, %s68
      %s85 = sphi 0, %s69
      %s93 = sphi 0, %s95
      %s96 = sphi 0, %s93
      %s97 = sphi 0, %s96
      %s113 = sphi 0, %s97
      %s121 = sphi 0, %s123
      %s124 = sphi 0, %s121
      %s125 = sphi 0, %s124
      %s141 = sphi 0, %s125
      %s145 = sphi 0, %s145
      %s147 = sphi 0, %s145
      %s148 = sphi 0, %s147
      %s162 = sphi 0, %s148
      %s166 = sphi 0, %s166
      %s168 = sphi 0, %s166
      %s169 = sphi 0, %s168
      %s183 = sphi 0, %s169
      %s187 = sphi 0, %s187
      %s189 = sphi 0, %s187
      %s190 = sphi 0, %s189
      %s204 = sphi 0, %s190
      %s208 = sphi 0, %s208
      %s210 = sphi 0, %s208
      %s211 = sphi 0, %s210
      %s225 = sphi 0, %s211
      %s233 = sphi 0, %s235
      %s236 = sphi 0, %s233
      %s237 = sphi 0, %s236
      %s253 = sphi 0, %s237
    $region4: #{feature_assembler.1} parent=1 // loop_header_branch
      %20 = sbr.rel (%p18) target = $region8
    $region5: #{feature_assembler.1} parent=1 // loop_body
      %s22 = ssub.s32 %s17, 1
      %s23 = ssub.s32 %s17, 2
      %s30 = sadd.s32 1, %s25
      %p31 = scmp.ge.s32.totalorder %s30, 1
      %s32 = scalar_select %p31, 0, %s30
      %s33 = sadd.s32 1, %s24
      %s34 = scalar_select %p31, %s33, %s24
      %p35 = scmp.ge.s32.totalorder %s34, 2
      %s36 = scalar_select %p35, 0, %s34
      %s37 = ssub.s32 %s24, %s36
      %p38 = scmp.eq.s32.totalorder %s37, 0
      %s40 = sadd.s32 %s39, 1
      %s41 = scalar_select %p38, %s39, %s40
      %p44 = pneg %p38
      %p45 = scmp.eq.s32.totalorder %s17, 1
      %p46 = por %p44, %p45
      %p47 = scmp.ne.s32.totalorder %s39, %s42
      %p48 = scmp.eq.s32.totalorder %s17, 0
      %p49 = por %p47, %p48
      %p50 = scmp.ne.s32.totalorder %s39, %s42
      %p51 = scmp.eq.s32.totalorder %s22, 1
      %p52 = por %p50, %p51
      %p53 = scmp.ne.s32.totalorder %s42, %s43
      %p54 = scmp.eq.s32.totalorder %s22, 0
      %p55 = por %p53, %p54
      %p56 = scmp.ne.s32.totalorder %s42, %s43
      %p57 = scmp.eq.s32.totalorder %s23, 1
      %p58 = por %p56, %p57
      %p60 = scmp.ne.s32.totalorder %s43, %s59
      %p61 = scmp.eq.s32.totalorder %s23, 0
      %p62 = por %p60, %p61
      %s63 = ssub.s32 %s24, %s36
      %p64 = scmp.eq.s32.totalorder %s63, 0
      %s66 = sadd.s32 %s65, 1
      %s67 = scalar_select %p64, %s65, %s66
      %p70 = pneg %p64
      %p71 = scmp.eq.s32.totalorder %s17, 1
      %p72 = por %p70, %p71
      %p73 = scmp.ne.s32.totalorder %s65, %s68
      %p74 = scmp.eq.s32.totalorder %s17, 0
      %p75 = por %p73, %p74
      %p76 = scmp.ne.s32.totalorder %s65, %s68
      %p77 = scmp.eq.s32.totalorder %s22, 1
      %p78 = por %p76, %p77
      %p79 = scmp.ne.s32.totalorder %s68, %s69
      %p80 = scmp.eq.s32.totalorder %s22, 0
      %p81 = por %p79, %p80
      %p82 = scmp.ne.s32.totalorder %s68, %s69
      %p83 = scmp.eq.s32.totalorder %s23, 1
      %p84 = por %p82, %p83
      %p86 = scmp.ne.s32.totalorder %s69, %s85
      %p87 = scmp.eq.s32.totalorder %s23, 0
      %p88 = por %p86, %p87
      %s89 = ssub.s32 %s24, %s36
      %s90 = ssub.s32 %s25, %s32
      %s91 = sor.u32 %s89, %s90
      %p92 = scmp.eq.s32.totalorder %s91, 0
      %s94 = sadd.s32 %s93, 1
      %s95 = scalar_select %p92, %s93, %s94
      %p98 = pneg %p92
      %p99 = scmp.eq.s32.totalorder %s17, 1
      %p100 = por %p98, %p99
      %p101 = scmp.ne.s32.totalorder %s93, %s96
      %p102 = scmp.eq.s32.totalorder %s17, 0
      %p103 = por %p101, %p102
      %p104 = scmp.ne.s32.totalorder %s93, %s96
      %p105 = scmp.eq.s32.totalorder %s22, 1
      %p106 = por %p104, %p105
      %p107 = scmp.ne.s32.totalorder %s96, %s97
      %p108 = scmp.eq.s32.totalorder %s22, 0
      %p109 = por %p107, %p108
      %p110 = scmp.ne.s32.totalorder %s96, %s97
      %p111 = scmp.eq.s32.totalorder %s23, 1
      %p112 = por %p110, %p111
      %p114 = scmp.ne.s32.totalorder %s97, %s113
      %p115 = scmp.eq.s32.totalorder %s23, 0
      %p116 = por %p114, %p115
      %s117 = ssub.s32 %s24, %s36
      %s118 = ssub.s32 %s25, %s32
      %s119 = sor.u32 %s117, %s118
      %p120 = scmp.eq.s32.totalorder %s119, 0
      %s122 = sadd.s32 %s121, 1
      %s123 = scalar_select %p120, %s121, %s122
      %p126 = pneg %p120
      %p127 = scmp.eq.s32.totalorder %s17, 1
      %p128 = por %p126, %p127
      %p129 = scmp.ne.s32.totalorder %s121, %s124
      %p130 = scmp.eq.s32.totalorder %s17, 0
      %p131 = por %p129, %p130
      %p132 = scmp.ne.s32.totalorder %s121, %s124
      %p133 = scmp.eq.s32.totalorder %s22, 1
      %p134 = por %p132, %p133
      %p135 = scmp.ne.s32.totalorder %s124, %s125
      %p136 = scmp.eq.s32.totalorder %s22, 0
      %p137 = por %p135, %p136
      %p138 = scmp.ne.s32.totalorder %s124, %s125
      %p139 = scmp.eq.s32.totalorder %s23, 1
      %p140 = por %p138, %p139
      %p142 = scmp.ne.s32.totalorder %s125, %s141
      %p143 = scmp.eq.s32.totalorder %s23, 0
      %p144 = por %p142, %p143
      %s146 = sadd.s32 %s145, 1
      %p149 = scmp.eq.s32.totalorder %s17, 1
      %p150 = scmp.ne.s32.totalorder %s145, %s147
      %p151 = scmp.eq.s32.totalorder %s17, 0
      %p152 = por %p150, %p151
      %p153 = scmp.ne.s32.totalorder %s145, %s147
      %p154 = scmp.eq.s32.totalorder %s22, 1
      %p155 = por %p153, %p154
      %p156 = scmp.ne.s32.totalorder %s147, %s148
      %p157 = scmp.eq.s32.totalorder %s22, 0
      %p158 = por %p156, %p157
      %p159 = scmp.ne.s32.totalorder %s147, %s148
      %p160 = scmp.eq.s32.totalorder %s23, 1
      %p161 = por %p159, %p160
      %p163 = scmp.ne.s32.totalorder %s148, %s162
      %p164 = scmp.eq.s32.totalorder %s23, 0
      %p165 = por %p163, %p164
      %s167 = sadd.s32 %s166, 1
      %p170 = scmp.eq.s32.totalorder %s17, 1
      %p171 = scmp.ne.s32.totalorder %s166, %s168
      %p172 = scmp.eq.s32.totalorder %s17, 0
      %p173 = por %p171, %p172
      %p174 = scmp.ne.s32.totalorder %s166, %s168
      %p175 = scmp.eq.s32.totalorder %s22, 1
      %p176 = por %p174, %p175
      %p177 = scmp.ne.s32.totalorder %s168, %s169
      %p178 = scmp.eq.s32.totalorder %s22, 0
      %p179 = por %p177, %p178
      %p180 = scmp.ne.s32.totalorder %s168, %s169
      %p181 = scmp.eq.s32.totalorder %s23, 1
      %p182 = por %p180, %p181
      %p184 = scmp.ne.s32.totalorder %s169, %s183
      %p185 = scmp.eq.s32.totalorder %s23, 0
      %p186 = por %p184, %p185
      %s188 = sadd.s32 %s187, 1
      %p191 = scmp.eq.s32.totalorder %s17, 1
      %p192 = scmp.ne.s32.totalorder %s187, %s189
      %p193 = scmp.eq.s32.totalorder %s17, 0
      %p194 = por %p192, %p193
      %p195 = scmp.ne.s32.totalorder %s187, %s189
      %p196 = scmp.eq.s32.totalorder %s22, 1
      %p197 = por %p195, %p196
      %p198 = scmp.ne.s32.totalorder %s189, %s190
      %p199 = scmp.eq.s32.totalorder %s22, 0
      %p200 = por %p198, %p199
      %p201 = scmp.ne.s32.totalorder %s189, %s190
      %p202 = scmp.eq.s32.totalorder %s23, 1
      %p203 = por %p201, %p202
      %p205 = scmp.ne.s32.totalorder %s190, %s204
      %p206 = scmp.eq.s32.totalorder %s23, 0
      %p207 = por %p205, %p206
      %s209 = sadd.s32 %s208, 1
      %p212 = scmp.eq.s32.totalorder %s17, 1
      %p213 = scmp.ne.s32.totalorder %s208, %s210
      %p214 = scmp.eq.s32.totalorder %s17, 0
      %p215 = por %p213, %p214
      %p216 = scmp.ne.s32.totalorder %s208, %s210
      %p217 = scmp.eq.s32.totalorder %s22, 1
      %p218 = por %p216, %p217
      %p219 = scmp.ne.s32.totalorder %s210, %s211
      %p220 = scmp.eq.s32.totalorder %s22, 0
      %p221 = por %p219, %p220
      %p222 = scmp.ne.s32.totalorder %s210, %s211
      %p223 = scmp.eq.s32.totalorder %s23, 1
      %p224 = por %p222, %p223
      %p226 = scmp.ne.s32.totalorder %s211, %s225
      %p227 = scmp.eq.s32.totalorder %s23, 0
      %p228 = por %p226, %p227
      %s229 = ssub.s32 %s24, %s36
      %s230 = ssub.s32 %s25, %s32
      %s231 = sor.u32 %s229, %s230
      %p232 = scmp.eq.s32.totalorder %s231, 0
      %s234 = sadd.s32 %s233, 1
      %s235 = scalar_select %p232, %s233, %s234
      %p238 = pneg %p232
      %p239 = scmp.eq.s32.totalorder %s17, 1
      %p240 = por %p238, %p239
      %p241 = scmp.ne.s32.totalorder %s233, %s236
      %p242 = scmp.eq.s32.totalorder %s17, 0
      %p243 = por %p241, %p242
      %p244 = scmp.ne.s32.totalorder %s233, %s236
      %p245 = scmp.eq.s32.totalorder %s22, 1
      %p246 = por %p244, %p245
      %p247 = scmp.ne.s32.totalorder %s236, %s237
      %p248 = scmp.eq.s32.totalorder %s22, 0
      %p249 = por %p247, %p248
      %p250 = scmp.ne.s32.totalorder %s236, %s237
      %p251 = scmp.eq.s32.totalorder %s23, 1
      %p252 = por %p250, %p251
      %p254 = scmp.ne.s32.totalorder %s237, %s253
      %p255 = scmp.eq.s32.totalorder %s23, 0
      %p256 = por %p254, %p255
      %p257 = scmp.le.s32.totalorder 1, %s17
      %p258 = scmp.lt.s32.totalorder %s17, 3
      %p259 = pnand %p257, %p258
      %p260 = pneg %p259
      // Predicated region
      $region9: #{feature_assembler.1} parent=5 // pred_check
        _
      $region10: #{feature_assembler.1} parent=5 // pred_check_branch
        %262 = sbr.rel (%p259) target = $region12
      $region11: #{feature_assembler.1} parent=5 // pred_region
        %s263 = ssub.s32 %s17, 1
        // Predicated region
        $region13: #{feature_assembler.1} parent=11 // pred_check
          %p264 = pneg %p158
        $region14: #{feature_assembler.1} parent=11 // pred_check_branch
          %266 = sbr.rel (%p264) target = $region16
        $region15: #{feature_assembler.1} parent=11 // pred_region
          _
        $region16: #{feature_assembler.1} parent=11 // pred_fallthru
          _
        // Predicated region
        $region17: #{feature_assembler.1} parent=11 // pred_check
          %p267 = pneg %p179
        $region18: #{feature_assembler.1} parent=11 // pred_check_branch
          %269 = sbr.rel (%p267) target = $region20
        $region19: #{feature_assembler.1} parent=11 // pred_region
          _
        $region20: #{feature_assembler.1} parent=11 // pred_fallthru
          _
        // Predicated region
        $region21: #{feature_assembler.1} parent=11 // pred_check
          %p270 = pneg %p200
        $region22: #{feature_assembler.1} parent=11 // pred_check_branch
          %272 = sbr.rel (%p270) target = $region24
        $region23: #{feature_assembler.1} parent=11 // pred_region
          _
        $region24: #{feature_assembler.1} parent=11 // pred_fallthru
          _
        // Predicated region
        $region25: #{feature_assembler.1} parent=11 // pred_check
          %p273 = pneg %p221
        $region26: #{feature_assembler.1} parent=11 // pred_check_branch
          %275 = sbr.rel (%p273) target = $region28
        $region27: #{feature_assembler.1} parent=11 // pred_region
          _
        $region28: #{feature_assembler.1} parent=11 // pred_fallthru
          _
      $region12: #{feature_assembler.1} parent=5 // pred_fallthru
        _
      %p276 = scmp.lt.s32.totalorder %s17, 2
      // Predicated region
      $region29: #{feature_assembler.1} parent=5 // pred_check
        %p277 = pneg %p276
      $region30: #{feature_assembler.1} parent=5 // pred_check_branch
        %279 = sbr.rel (%p277) target = $region32
      $region31: #{feature_assembler.1} parent=5 // pred_region
        // Predicated region
        $region33: #{feature_assembler.1} parent=31 // pred_check
          %p280 = pneg %p49
        $region34: #{feature_assembler.1} parent=31 // pred_check_branch
          %282 = sbr.rel (%p280) target = $region36
        $region35: #{feature_assembler.1} parent=31 // pred_region
          %p283 = scmp.lt.s32.totalorder %s24, 1
          %s284 = scalar_select %p283, %s24, 1
          %s285 = scalar_lea.vmem %s0, %s284
        $region36: #{feature_assembler.1} parent=31 // pred_fallthru
          _
        // Predicated region
        $region37: #{feature_assembler.1} parent=31 // pred_check
          %p286 = pneg %p75
        $region38: #{feature_assembler.1} parent=31 // pred_check_branch
          %288 = sbr.rel (%p286) target = $region40
        $region39: #{feature_assembler.1} parent=31 // pred_region
          %p289 = scmp.lt.s32.totalorder %s24, 1
          %s290 = scalar_select %p289, %s24, 1
          %s291 = scalar_lea.vmem %s1, %s290
        $region40: #{feature_assembler.1} parent=31 // pred_fallthru
          _
        // Predicated region
        $region41: #{feature_assembler.1} parent=31 // pred_check
          %p292 = pneg %p103
        $region42: #{feature_assembler.1} parent=31 // pred_check_branch
          %294 = sbr.rel (%p292) target = $region44
        $region43: #{feature_assembler.1} parent=31 // pred_region
          %p295 = scmp.lt.s32.totalorder %s24, 1
          %s296 = scalar_select %p295, %s24, 1
          %p297 = scmp.lt.s32.totalorder %s25, 0
          %s298 = scalar_select %p297, %s25, 0
          %s299 = sadd.s32 %s298, %s296
          %s300 = smul.addr %s299, 8
          %s301 = scalar_lea.vmem %s2, %s300
        $region44: #{feature_assembler.1} parent=31 // pred_fallthru
          _
        // Predicated region
        $region45: #{feature_assembler.1} parent=31 // pred_check
          %p302 = pneg %p131
        $region46: #{feature_assembler.1} parent=31 // pred_check_branch
          %304 = sbr.rel (%p302) target = $region48
        $region47: #{feature_assembler.1} parent=31 // pred_region
          %p305 = scmp.lt.s32.totalorder %s24, 1
          %s306 = scalar_select %p305, %s24, 1
          %p307 = scmp.lt.s32.totalorder %s25, 0
          %s308 = scalar_select %p307, %s25, 0
          %s309 = sadd.s32 %s308, %s306
          %s310 = smul.addr %s309, 8
          %s311 = scalar_lea.vmem %s3, %s310
        $region48: #{feature_assembler.1} parent=31 // pred_fallthru
          _
      $region32: #{feature_assembler.1} parent=5 // pred_fallthru
        _
      %p312 = scmp.le.s32.totalorder 1, %s17
      %p313 = scmp.lt.s32.totalorder %s17, 3
      %p314 = pnand %p312, %p313
      %p315 = pneg %p314
      // Predicated region
      $region49: #{feature_assembler.1} parent=5 // pred_check
        _
      $region50: #{feature_assembler.1} parent=5 // pred_check_branch
        %317 = sbr.rel (%p314) target = $region52
      $region51: #{feature_assembler.1} parent=5 // pred_region
        %s318 = ssub.s32 %s17, 1
        %p319 = scmp.lt.s32.totalorder %s26, 1
        %s320 = scalar_select %p319, %s26, 1
        %s321 = scalar_lea.vmem %s0, %s320
        %p322 = pneg %p55
        %p323 = pneg %p52
        %p324 = scmp.lt.s32.totalorder %s26, 1
        %s325 = scalar_select %p324, %s26, 1
        %s326 = scalar_lea.vmem %s1, %s325
        %p327 = pneg %p81
        %p328 = pneg %p78
        %p329 = scmp.lt.s32.totalorder %s26, 1
        %s330 = scalar_select %p329, %s26, 1
        %p331 = scmp.lt.s32.totalorder %s27, 0
        %s332 = scalar_select %p331, %s27, 0
        %s333 = sadd.s32 %s332, %s330
        %s334 = smul.addr %s333, 8
        %s335 = scalar_lea.vmem %s2, %s334
        %p336 = pneg %p109
        %p337 = pneg %p106
        %p338 = scmp.lt.s32.totalorder %s26, 1
        %s339 = scalar_select %p338, %s26, 1
        %p340 = scmp.lt.s32.totalorder %s27, 0
        %s341 = scalar_select %p340, %s27, 0
        %s342 = sadd.s32 %s341, %s339
        %s343 = smul.addr %s342, 8
        %s344 = scalar_lea.vmem %s3, %s343
        %p345 = pneg %p137
        %p346 = pneg %p134
        %p347 = pneg %p158
        %p348 = pneg %p155
        %p349 = pneg %p179
        %p350 = pneg %p176
        %p351 = pneg %p200
        %p352 = pneg %p197
        %p353 = pneg %p221
        %p354 = pneg %p218
        %p355 = pneg %p249
        %p356 = pneg %p246
        %s357 = sand.u32 %s236, 1
        %s358 = scalar_lea.sflag [#allocation3], %s357
        %s359 = sand.u32 %s236, 1
        %s360 = smul.addr %s359, 8
        %s361 = scalar_lea.vmem [#allocation2], %s360
        %p362 = scmp.lt.s32.totalorder %s26, 1
        %s363 = scalar_select %p362, %s26, 1
        %s364 = scalar_lea.vmem %s0, %s363
        %p365 = scmp.lt.s32.totalorder %s26, 1
        %s366 = scalar_select %p365, %s26, 1
        %s367 = scalar_lea.vmem %s1, %s366
        %p368 = scmp.lt.s32.totalorder %s26, 1
        %s369 = scalar_select %p368, %s26, 1
        %p370 = scmp.lt.s32.totalorder %s27, 0
        %s371 = scalar_select %p370, %s27, 0
        %s372 = sadd.s32 %s371, %s369
        %s373 = smul.addr %s372, 8
        %s374 = scalar_lea.vmem %s2, %s373
        %p375 = scmp.lt.s32.totalorder %s26, 1
        %s376 = scalar_select %p375, %s26, 1
        %p377 = scmp.lt.s32.totalorder %s27, 0
        %s378 = scalar_select %p377, %s27, 0
        %s379 = sadd.s32 %s378, %s376
        %s380 = smul.addr %s379, 8
        %s381 = scalar_lea.vmem %s3, %s380
        %v382 = vld [vmem:[%s364] sm:$0x1]
        %v383 = vld [vmem:[%s4] sm:$0x1f]
        %v384 = vlaneseq
        %v385 = vand.u32 %v384, 127
        %386 = vset.pattern.permute.xlu0 0
        %387 = vperm.xlu0 %386, %v382
        %v388 = vpop.permute.xlu0 %387
        %v389 = vperm.slane %v388, 0
        %vm390 = vcmp.eq.s32.totalorder %v389, %v385
        %v391 = vsel %vm390, 1, 0
        %v392 = vcvt.s32.f32 %v391
        %vm393 = vcmask 39936
        %v395 = vsel %vm393, %v392, 0
        %vm397 = vcmask 1044480
        %v399 = vsel %vm397, %v383, 0
        %401 = vmatpush.msra.mxu0 0.0
        %402 = vmatpush.msra.mxu0 0.0
        %403 = vmatpush.msra.mxu0 0.0
        %404 = vmatpush.msra.mxu0 0.0
        %405 = vmatpush.msra.mxu0 0.0
        %406 = vmatpush.msra.mxu0 0.0
        %407 = vmatpush.msra.mxu0 0.0
        %408 = vmatpush.msra.mxu0 0.0
        %409 = vmatpush.msra.mxu0 0.0
        %410 = vmatpush.msra.mxu0 0.0
        %411 = vmatpush.msra.mxu0 0.0
        %412 = vmatpush.msra.mxu0 0.0
        %413 = vmatpush.msra.mxu0 0.0
        %414 = vmatpush.msra.mxu0 0.0
        %415 = vmatpush.msra.mxu0 0.0
        %416 = vmatpush.msra.mxu0 %v399
        %417 = vmatmul.f32.gmra.mxu0 %v395
        %v418 = vpop.f32.mrf.mxu0
        %v419 = vadd.f32 0.0, %v418
        %420 = vdwg.mxu0
        %v421 = vld [vmem:[%s5] sm:$0x7f]
        %422 = vset.pattern.permute.xlu0 1
        %423 = vperm.xlu0 %422, %v382
        %v424 = vpop.permute.xlu0 %423
        %v425 = vperm.slane %v424, 0
        %vm426 = vcmp.eq.s32.totalorder %v425, %v385
        %v427 = vsel %vm426, 1, 0
        %v428 = vcvt.s32.f32 %v427
        %vm429 = vcmask 56320
        %v431 = vsel %vm429, %v428, 0
        %vm433 = vcmask 1046528
        %v435 = vsel %vm433, %v421, 0
        %437 = vmatpush.msra.mxu0 0.0
        %438 = vmatpush.msra.mxu0 0.0
        %439 = vmatpush.msra.mxu0 0.0
        %440 = vmatpush.msra.mxu0 0.0
        %441 = vmatpush.msra.mxu0 0.0
        %442 = vmatpush.msra.mxu0 0.0
        %443 = vmatpush.msra.mxu0 0.0
        %444 = vmatpush.msra.mxu0 0.0
        %445 = vmatpush.msra.mxu0 0.0
        %446 = vmatpush.msra.mxu0 0.0
        %447 = vmatpush.msra.mxu0 0.0
        %448 = vmatpush.msra.mxu0 0.0
        %449 = vmatpush.msra.mxu0 0.0
        %450 = vmatpush.msra.mxu0 0.0
        %451 = vmatpush.msra.mxu0 0.0
        %452 = vmatpush.msra.mxu0 %v435
        %453 = vmatmul.f32.gmra.mxu0 %v431
        %v454 = vpop.f32.mrf.mxu0
        %v455 = vadd.f32 0.0, %v454
        %456 = vdwg.mxu0
        %458 = vrot.lane.b32.xlu0 %v455, 3
        %v459 = vpop.permute.xlu0 %458
        %vm461 = vcmask 23552
        %v462 = vsel %vm461, %v419, %v459
        %v463 = vperm.slane %v462, 0
        %v464 = vld [vmem:[%s367] sm:$0x1]
        %v466 = vperm.slane %v464, 0
        %v467 = vld [vmem:[%s374] sm:$0xff]
        %v468 = vld [vmem:[%s6] sm:$0xff]
        %v469 = vld [vmem:[%s6 + $0x8] sm:$0x7]
        %470 = vset.pattern.permute.xlu0 0
        %471 = vperm.xlu0 %470, %v467
        %v472 = vpop.permute.xlu0 %471
        %vm473 = vcmp.eq.s32.totalorder %v472, %v385
        %v474 = vsel %vm473, 1, 0
        %v475 = vcvt.s32.f32 %v474
        %vm476 = vcmask 89088
        %v478 = vsel %vm476, %v475, 0
        %vm480 = vcmask 1042432
        %v482 = vsel %vm480, %v469, 0
        %484 = vmatpush.msra.mxu0 0.0
        %485 = vmatpush.msra.mxu0 0.0
        %486 = vmatpush.msra.mxu0 0.0
        %487 = vmatpush.msra.mxu0 0.0
        %488 = vmatpush.msra.mxu0 0.0
        %489 = vmatpush.msra.mxu0 0.0
        %490 = vmatpush.msra.mxu0 0.0
        %491 = vmatpush.msra.mxu0 0.0
        %492 = vmatpush.msra.mxu0 0.0
        %493 = vmatpush.msra.mxu0 0.0
        %494 = vmatpush.msra.mxu0 0.0
        %495 = vmatpush.msra.mxu0 0.0
        %496 = vmatpush.msra.mxu0 0.0
        %497 = vmatpush.msra.mxu0 0.0
        %498 = vmatpush.msra.mxu0 %v482
        %499 = vmatpush.msra.mxu0 %v468
        %500 = vmatmul.f32.gmra.mxu0 %v478
        %v501 = vpop.f32.mrf.mxu0
        %v502 = vadd.f32 0.0, %v501
        %503 = vdwg.mxu0
        %v504 = vld [vmem:[%s7] sm:$0x7]
        %505 = vset.pattern.permute.xlu0 1
        %506 = vperm.xlu0 %505, %v467
        %v507 = vpop.permute.xlu0 %506
        %vm508 = vcmp.eq.s32.totalorder %v507, %v385
        %v509 = vsel %vm508, 1, 0
        %v510 = vcvt.s32.f32 %v509
        %v512 = vsel %vm461, %v510, 0
        %v515 = vsel %vm480, %v504, 0
        %517 = vmatpush.msra.mxu0 0.0
        %518 = vmatpush.msra.mxu0 0.0
        %519 = vmatpush.msra.mxu0 0.0
        %520 = vmatpush.msra.mxu0 0.0
        %521 = vmatpush.msra.mxu0 0.0
        %522 = vmatpush.msra.mxu0 0.0
        %523 = vmatpush.msra.mxu0 0.0
        %524 = vmatpush.msra.mxu0 0.0
        %525 = vmatpush.msra.mxu0 0.0
        %526 = vmatpush.msra.mxu0 0.0
        %527 = vmatpush.msra.mxu0 0.0
        %528 = vmatpush.msra.mxu0 0.0
        %529 = vmatpush.msra.mxu0 0.0
        %530 = vmatpush.msra.mxu0 0.0
        %531 = vmatpush.msra.mxu0 0.0
        %532 = vmatpush.msra.mxu0 %v515
        %533 = vmatmul.f32.gmra.mxu0 %v512
        %v534 = vpop.f32.mrf.mxu0
        %v535 = vadd.f32 0.0, %v534
        %536 = vdwg.mxu0
        %538 = vrot.lane.b32.xlu0 %v535, 6
        %v539 = vpop.permute.xlu0 %538
        %vm541 = vcmask 48128
        %v542 = vsel %vm541, %v502, %v539
        %v543 = vld [vmem:[%s381] sm:$0xff]
        %544 = vrot.lane.b32.xlu0 %v466, 7
        %v545 = vpop.permute.xlu0 %544
        %548 = vrot.lane.b32.xlu0 %v542, 11
        %v549 = vpop.permute.xlu0 %548
        %552 = vrot.lane.b32.xlu0 %v543, 19
        %v553 = vpop.permute.xlu0 %552
        %v555 = vsel %vm429, %v463, %v545
        %v556 = vsel %vm476, %v555, %v549
        %vm557 = vcmask 154624
        %v558 = vsel %vm557, %v556, %v553
        %vm559 = vcmask 195584
        %560 = vst.msk [vmem:[%s361] sm:$0xff] %vm559, %v558
        %s561 = sand.u32 %s236, 1
        %s562 = scalar_lea.sflag [#allocation3], %s561
        %s563 = sand.u32 %s236, 1
        %s564 = smul.addr %s563, 8
        %s565 = scalar_lea.vmem [#allocation2], %s564
        // Predicated region
        $region53: #{feature_assembler.1} parent=51 // pred_check
          %p566 = pneg %p246
        $region54: #{feature_assembler.1} parent=51 // pred_check_branch
          %568 = sbr.rel (%p566) target = $region56
        $region55: #{feature_assembler.1} parent=51 // pred_region
          %570 = vsyncadd %s562, 0
          %s571 = sadd.s32 %s27, %s26
          %s572 = smul.addr %s571, 8
          %s573 = scalar_lea.hbm %s8, %s572
          %s575 = sshll.u32 %s565, 4
          %s576 = int_to_ptr.vmem [resolvable:$true] %s575
          %s577 = sshll.u32 %s573, 4
          %s578 = int_to_ptr.hbm [resolvable:$true] %s577
          %580 = dma.vmem_to_hbm [thread:$0]  %s576, 128, %s578, %s562
        $region56: #{feature_assembler.1} parent=51 // pred_fallthru
          _
      $region52: #{feature_assembler.1} parent=5 // pred_fallthru
        _
      %p581 = scmp.le.s32.totalorder 2, %s17
      // Predicated region
      $region57: #{feature_assembler.1} parent=5 // pred_check
        %p582 = pneg %p581
      $region58: #{feature_assembler.1} parent=5 // pred_check_branch
        %584 = sbr.rel (%p582) target = $region60
      $region59: #{feature_assembler.1} parent=5 // pred_region
        %s585 = ssub.s32 %s17, 2
        // Predicated region
        $region61: #{feature_assembler.1} parent=59 // pred_check
          %p586 = pneg %p252
        $region62: #{feature_assembler.1} parent=59 // pred_check_branch
          %588 = sbr.rel (%p586) target = $region64
        $region63: #{feature_assembler.1} parent=59 // pred_region
          %s589 = sand.u32 %s237, 1
          %s590 = scalar_lea.sflag [#allocation3], %s589
          %s591 = sand.u32 %s237, 1
          %s592 = smul.addr %s591, 8
          %s593 = scalar_lea.vmem [#allocation2], %s592
          %595 = dma.done %s590, 128
        $region64: #{feature_assembler.1} parent=59 // pred_fallthru
          _
      $region60: #{feature_assembler.1} parent=5 // pred_fallthru
        _
    $region6: #{feature_assembler.1} parent=1 // loop_footer
      %s21 = sadd.s32 1, %s17
    $region7: #{feature_assembler.1} parent=1 // loop_footer_branch
      %16 = sbr.rel target = $region3
    $region8: #{feature_assembler.1} parent=1 // loop_exit
      _
    %596 = vsyncpa [#allocation3], 1
    %s597 = scalar_lea.sflag [#allocation3], 1
    %598 = vsyncpa %s597, 1

</llo_original>
